<compile_context>
chip_gen: v7x
topology: tpu7x:2x2x1
jax: 0.10.0
libtpu: 0.0.40
codegen_flags: <defaults>
</compile_context>

<pallas_src>
import functools

import jax
import jax.numpy as jnp
from jax import lax
from jax.experimental import pallas as pl
from jax.experimental.pallas import tpu as pltpu

_LANE = 128                  # lane width: hidden dim padded to this
_DEFAULT_BATCH_TILE = 1024   # batch rows per grid step for large batches


def _round_up(x, m):
    return (x + m - 1) // m * m


# --------------------------------------------------------------------------
# Kernel
# --------------------------------------------------------------------------
def _actor_kernel(x_ref, g_ref, p1_ref, w2_ref, out_ref, *,
                  state_dim, goal_dim, a_rows,
                  b12_off, b3_off, w1x_off, w1g_off, w3t_off,
                  max_action, use_tanh):
    """One batch tile of the 3-layer MLP, output stored transposed.

    x_ref  : f32  [tb, state_dim]
    g_ref  : f32  [tb, goal_dim]
    p1_ref : f32  [*, 128]  rows b12_off/+1 = b1/b2, rows b3_off.. = b3 column,
                            rows w1x_off.. = W1(state), rows w1g_off.. = W1(goal),
                            rows w3t_off.. = W3^T (out-major)
    w2_ref : bf16 [128, 128]  W2 (resident)
    out_ref: f32  [a_rows, tb]  transposed actions (row j = action j)
    """
    bf = jnp.bfloat16

    x = x_ref[...].astype(bf)                                   # [tb, S]
    g = g_ref[...].astype(bf)                                   # [tb, G]

    b1 = p1_ref[b12_off:b12_off + 1, :]                         # [1, 128]
    b2 = p1_ref[b12_off + 1:b12_off + 2, :]                     # [1, 128]
    b3 = p1_ref[b3_off:b3_off + a_rows, 0:1]                    # [a_rows, 1]
    w1x = p1_ref[w1x_off:w1x_off + state_dim, :].astype(bf)     # [S, 128]
    w1g = p1_ref[w1g_off:w1g_off + goal_dim, :].astype(bf)      # [G, 128]
    w3t = p1_ref[w3t_off:w3t_off + a_rows, :].astype(bf)        # [a_rows, 128]
    w2 = w2_ref[...]                                            # [128, 128] bf16

    # Layer 1: concat([x, g]) @ W1 folded into two MXU dots, f32 accumulation.
    h = (jnp.dot(x, w1x, preferred_element_type=jnp.float32)
         + jnp.dot(g, w1g, preferred_element_type=jnp.float32)
         + b1)
    h = jnp.maximum(h, 0.0)

    # Layer 2 + ReLU.
    h = jnp.dot(h.astype(bf), w2, preferred_element_type=jnp.float32) + b2
    h = jnp.maximum(h, 0.0)

    # Layer 3, computed transposed: [a_rows, tb] = W3^T @ h^T via a
    # minor-minor contraction (same dimension_numbers as q @ k^T).
    a = lax.dot_general(w3t, h.astype(bf),
                        dimension_numbers=(((1,), (1,)), ((), ())),
                        preferred_element_type=jnp.float32)     # [a_rows, tb]
    a = a + b3                                                  # lane broadcast
    if use_tanh:
        a = max_action * jnp.tanh(a)

    out_ref[...] = a.astype(out_ref.dtype)


# --------------------------------------------------------------------------
# Parameter init / packing
# --------------------------------------------------------------------------
def init_actor_params(key, state_dim, goal_dim, action_dim, hidden_size=20):
    """PyTorch nn.Linear-style init (uniform +/- 1/sqrt(fan_in)).
    Weights are stored pre-transposed as [in_features, out_features], f32."""
    dims = [(state_dim + goal_dim, hidden_size),
            (hidden_size, hidden_size),
            (hidden_size, action_dim)]
    params = []
    for fan_in, fan_out in dims:
        key, kw, kb = jax.random.split(key, 3)
        bound = 1.0 / (fan_in ** 0.5)
        w = jax.random.uniform(kw, (fan_in, fan_out), jnp.float32, -bound, bound)
        b = jax.random.uniform(kb, (1, fan_out), jnp.float32, -bound, bound)
        params += [w, b]
    return tuple(params)


def pack_actor_params(params, state_dim, goal_dim, action_dim):
    """Pad + pack the 6 Linear params into 2 TPU-friendly resident buffers."""
    w1, b1, w2, b2, w3, b3 = params
    hidden = w1.shape[1]
    width = _round_up(hidden, _LANE)                 # 128
    a_rows = _round_up(max(action_dim, 1), 8)        # sublane rows of the output

    # ---- buffer 1 (f32): biases + split W1 + W3^T, 8-row aligned segments --
    b12_off = 0
    b3_off = 8
    w1x_off = b3_off + a_rows
    w1g_off = w1x_off + _round_up(state_dim, 8)
    w3t_off = w1g_off + _round_up(goal_dim, 8)
    rows = w3t_off + a_rows

    p1 = jnp.zeros((rows, width), jnp.float32)
    p1 = p1.at[b12_off, :hidden].set(b1.reshape(-1))
    p1 = p1.at[b12_off + 1, :hidden].set(b2.reshape(-1))
    p1 = p1.at[b3_off:b3_off + action_dim, 0].set(b3.reshape(-1))
    p1 = p1.at[w1x_off:w1x_off + state_dim, :hidden].set(w1[:state_dim])
    p1 = p1.at[w1g_off:w1g_off + goal_dim, :hidden].set(w1[state_dim:])
    p1 = p1.at[w3t_off:w3t_off + action_dim, :hidden].set(w3.T)

    # ---- buffer 2 (bf16): W2 padded to [128, 128] -------------------------
    w2b = jnp.zeros((width, width), jnp.float32)
    w2b = w2b.at[:hidden, :hidden].set(w2).astype(jnp.bfloat16)

    meta = dict(state_dim=state_dim, goal_dim=goal_dim, action_dim=action_dim,
                width=width, a_rows=a_rows, b12_off=b12_off, b3_off=b3_off,
                w1x_off=w1x_off, w1g_off=w1g_off, w3t_off=w3t_off)
    return p1, w2b, meta


# --------------------------------------------------------------------------
# Wrapper
# --------------------------------------------------------------------------
def actor_forward(x, g, p1, w2b, meta, *, max_action, use_tanh,
                  batch_tile=_DEFAULT_BATCH_TILE):
    """x: [B, state_dim], g: [B, goal_dim]. Returns f32 [B, action_dim]."""
    batch = x.shape[0]
    state_dim = meta["state_dim"]
    goal_dim = meta["goal_dim"]
    action_dim = meta["action_dim"]
    width = meta["width"]
    a_rows = meta["a_rows"]

    # Batch tile = lane dim of the transposed output: multiple of 128 (or the
    # full batch).  For batch > 128 force >= 2 grid steps so the "parallel"
    # grid axis shards across both v7x TensorCores.
    if batch <= _LANE:
        tb = batch
    else:
        half = _round_up((batch + 1) // 2, _LANE)
        tb = min(_round_up(batch_tile, _LANE), half)
    grid = (pl.cdiv(batch, tb),)

    kernel = functools.partial(
        _actor_kernel,
        state_dim=state_dim, goal_dim=goal_dim, a_rows=a_rows,
        b12_off=meta["b12_off"], b3_off=meta["b3_off"],
        w1x_off=meta["w1x_off"], w1g_off=meta["w1g_off"],
        w3t_off=meta["w3t_off"],
        max_action=float(max_action), use_tanh=bool(use_tanh))

    cost = pl.CostEstimate(
        flops=2 * batch * ((state_dim + goal_dim) * width
                           + width * width + width * a_rows),
        transcendentals=batch * a_rows if use_tanh else 0,
        bytes_accessed=(batch * (state_dim + goal_dim) * 4
                        + batch * a_rows * 4
                        + p1.size * 4 + w2b.size * 2))

    out_t = pl.pallas_call(
        kernel,
        out_shape=jax.ShapeDtypeStruct((a_rows, batch), jnp.float32),
        grid=grid,
        in_specs=[
            pl.BlockSpec((tb, state_dim), lambda i: (i, 0)),   # x  (streamed)
            pl.BlockSpec((tb, goal_dim), lambda i: (i, 0)),    # g  (streamed)
            pl.BlockSpec(p1.shape, lambda i: (0, 0)),          # biases/W1/W3^T
            pl.BlockSpec(w2b.shape, lambda i: (0, 0)),         # W2 (resident)
        ],
        out_specs=pl.BlockSpec((a_rows, tb), lambda i: (0, i)),
        compiler_params=pltpu.CompilerParams(
            dimension_semantics=("parallel",),
            vmem_limit_bytes=32 * 1024 * 1024),
        cost_estimate=cost,
    )(x, g, p1, w2b)

    # Tiny post-op: [a_rows, B] -> [B, action_dim] (reads 4 contiguous rows).
    return out_t[:action_dim, :].T


# --------------------------------------------------------------------------
# Pure-JAX reference (mirrors the kernel's bf16 matmul operands exactly)
# --------------------------------------------------------------------------
def _reference_forward(x, g, params, *, max_action, use_tanh):
    w1, b1, w2, b2, w3, b3 = params
    s = x.shape[1]
    bf = jnp.bfloat16
    h = (jnp.dot(x.astype(bf), w1[:s].astype(bf),
                 preferred_element_type=jnp.float32)
         + jnp.dot(g.astype(bf), w1[s:].astype(bf),
                   preferred_element_type=jnp.float32)
         + b1)
    h = jnp.maximum(h, 0.0)
    h = jnp.maximum(
        jnp.dot(h.astype(bf), w2.astype(bf),
                preferred_element_type=jnp.float32) + b2, 0.0)
    a = jnp.dot(h.astype(bf), w3.astype(bf),
                preferred_element_type=jnp.float32) + b3
    if use_tanh:
        a = max_action * jnp.tanh(a)
    return a


if __name__ == "__main__":
    state_dim, goal_dim, action_dim = 16, 8, 4
    max_action = 10.0

    key = jax.random.PRNGKey(0)
    kx, kg, kp = jax.random.split(key, 3)

    params = init_actor_params(kp, state_dim, goal_dim, action_dim)
    p1, w2b, meta = pack_actor_params(params, state_dim, goal_dim, action_dim)

    # Small batch (single block path, tb == batch).
    batch = 2
    x = jax.random.normal(kx, (batch, state_dim), jnp.float32)
    g = jax.random.normal(kg, (batch, goal_dim), jnp.float32)

    out = jax.block_until_ready(
        actor_forward(x, g, p1, w2b, meta, max_action=max_action, use_tanh=True))
    ref = _reference_forward(x, g, params, max_action=max_action, use_tanh=True)
    assert out.shape == (batch, action_dim)
    assert jnp.allclose(out, ref, atol=1e-4, rtol=1e-4), \
        float(jnp.max(jnp.abs(out - ref)))

    # use_tanh=False branch.
    out_nt = jax.block_until_ready(
        actor_forward(x, g, p1, w2b, meta, max_action=max_action, use_tanh=False))
    ref_nt = _reference_forward(x, g, params, max_action=max_action, use_tanh=False)
    assert jnp.allclose(out_nt, ref_nt, atol=1e-4, rtol=1e-4)

    # Larger, non-multiple batch: exercises the 2-step "parallel" grid
    # (v7x megacore) and the clipped partial last block.
    big_b = 500
    kx2, kg2 = jax.random.split(jax.random.PRNGKey(1))
    xb = jax.random.normal(kx2, (big_b, state_dim), jnp.float32)
    gb = jax.random.normal(kg2, (big_b, goal_dim), jnp.float32)
    out_b = jax.block_until_ready(
        actor_forward(xb, gb, p1, w2b, meta, max_action=max_action, use_tanh=True))
    ref_b = _reference_forward(xb, gb, params, max_action=max_action, use_tanh=True)
    assert out_b.shape == (big_b, action_dim)
    assert jnp.allclose(out_b, ref_b, atol=1e-4, rtol=1e-4), \
        float(jnp.max(jnp.abs(out_b - ref_b)))

    print("KERNEL_OK")
</pallas_src>

<mosaic_0001>
module attributes {stable_mosaic.version = 11 : i64} {
  func.func @_actor_kernel(%arg0: i32, %arg1: memref<2x16xf32, #tpu.memory_space<vmem>>, %arg2: memref<2x8xf32, #tpu.memory_space<vmem>>, %arg3: memref<48x128xf32, #tpu.memory_space<vmem>>, %arg4: memref<128x128xbf16, #tpu.memory_space<vmem>>, %arg5: memref<8x2xf32, #tpu.memory_space<vmem>>) attributes {dimension_semantics = [#tpu.dimension_semantics<parallel>], iteration_bounds = array<i64: 1>, scalar_prefetch = 0 : i64, scratch_operands = 0 : i64, tpu.core_type = #tpu.core_type<tc>, window_params = [{transform_indices = @transform_0, window_bounds = array<i64: 2, 16>}, {transform_indices = @transform_1, window_bounds = array<i64: 2, 8>}, {pipeline_mode = #tpu.pipeline_mode<synchronous>, transform_indices = @transform_2, window_bounds = array<i64: 48, 128>}, {pipeline_mode = #tpu.pipeline_mode<synchronous>, transform_indices = @transform_3, window_bounds = array<i64: 128, 128>}, {transform_indices = @transform_4, window_bounds = array<i64: 8, 2>}]} {
    %c0 = arith.constant 0 : index
    %c0_0 = arith.constant 0 : index
    %0 = vector.load %arg1[%c0, %c0_0] : memref<2x16xf32, #tpu.memory_space<vmem>>, vector<2x16xf32>
    %1 = arith.truncf %0 : vector<2x16xf32> to vector<2x16xbf16>
    %c0_1 = arith.constant 0 : index
    %c0_2 = arith.constant 0 : index
    %2 = vector.load %arg2[%c0_1, %c0_2] : memref<2x8xf32, #tpu.memory_space<vmem>>, vector<2x8xf32>
    %3 = arith.truncf %2 : vector<2x8xf32> to vector<2x8xbf16>
    %c0_3 = arith.constant 0 : index
    %c0_4 = arith.constant 0 : index
    %4 = vector.load %arg3[%c0_3, %c0_4] : memref<48x128xf32, #tpu.memory_space<vmem>>, vector<1x128xf32>
    %c1 = arith.constant 1 : index
    %c0_5 = arith.constant 0 : index
    %5 = vector.load %arg3[%c1, %c0_5] : memref<48x128xf32, #tpu.memory_space<vmem>>, vector<1x128xf32>
    %c8 = arith.constant 8 : index
    %c0_6 = arith.constant 0 : index
    %6 = vector.load %arg3[%c8, %c0_6] : memref<48x128xf32, #tpu.memory_space<vmem>>, vector<8x1xf32>
    %c16 = arith.constant 16 : index
    %c0_7 = arith.constant 0 : index
    %7 = vector.load %arg3[%c16, %c0_7] : memref<48x128xf32, #tpu.memory_space<vmem>>, vector<16x128xf32>
    %8 = arith.truncf %7 : vector<16x128xf32> to vector<16x128xbf16>
    %c32 = arith.constant 32 : index
    %c0_8 = arith.constant 0 : index
    %9 = vector.load %arg3[%c32, %c0_8] : memref<48x128xf32, #tpu.memory_space<vmem>>, vector<8x128xf32>
    %10 = arith.truncf %9 : vector<8x128xf32> to vector<8x128xbf16>
    %c40 = arith.constant 40 : index
    %c0_9 = arith.constant 0 : index
    %11 = vector.load %arg3[%c40, %c0_9] : memref<48x128xf32, #tpu.memory_space<vmem>>, vector<8x128xf32>
    %12 = arith.truncf %11 : vector<8x128xf32> to vector<8x128xbf16>
    %c0_10 = arith.constant 0 : index
    %c0_11 = arith.constant 0 : index
    %13 = vector.load %arg4[%c0_10, %c0_11] : memref<128x128xbf16, #tpu.memory_space<vmem>>, vector<128x128xbf16>
    %cst = arith.constant dense<0.000000e+00> : vector<2x128xf32>
    %14 = tpu.matmul %1, %8, %cst {dimension_numbers = #tpu.dot_dimension_numbers<[1], [0], [0], [1], [0, 0, 1, 1], [], []>} : vector<2x16xbf16>, vector<16x128xbf16>, vector<2x128xf32> -> vector<2x128xf32>
    %cst_12 = arith.constant dense<0.000000e+00> : vector<2x128xf32>
    %15 = tpu.matmul %3, %10, %cst_12 {dimension_numbers = #tpu.dot_dimension_numbers<[1], [0], [0], [1], [0, 0, 1, 1], [], []>} : vector<2x8xbf16>, vector<8x128xbf16>, vector<2x128xf32> -> vector<2x128xf32>
    %16 = arith.addf %14, %15 : vector<2x128xf32>
    %17 = vector.broadcast %4 : vector<1x128xf32> to vector<2x128xf32>
    %18 = arith.addf %16, %17 : vector<2x128xf32>
    %cst_13 = arith.constant 0.000000e+00 : f32
    %19 = vector.broadcast %cst_13 : f32 to vector<2x128xf32>
    %20 = arith.maximumf %18, %19 : vector<2x128xf32>
    %21 = arith.truncf %20 : vector<2x128xf32> to vector<2x128xbf16>
    %cst_14 = arith.constant dense<0.000000e+00> : vector<2x128xf32>
    %22 = tpu.matmul %21, %13, %cst_14 {dimension_numbers = #tpu.dot_dimension_numbers<[1], [0], [0], [1], [0, 0, 1, 1], [], []>} : vector<2x128xbf16>, vector<128x128xbf16>, vector<2x128xf32> -> vector<2x128xf32>
    %23 = vector.broadcast %5 : vector<1x128xf32> to vector<2x128xf32>
    %24 = arith.addf %22, %23 : vector<2x128xf32>
    %cst_15 = arith.constant 0.000000e+00 : f32
    %25 = vector.broadcast %cst_15 : f32 to vector<2x128xf32>
    %26 = arith.maximumf %24, %25 : vector<2x128xf32>
    %27 = arith.truncf %26 : vector<2x128xf32> to vector<2x128xbf16>
    %cst_16 = arith.constant dense<0.000000e+00> : vector<8x2xf32>
    %28 = tpu.matmul %12, %27, %cst_16 {dimension_numbers = #tpu.dot_dimension_numbers<[1], [1], [0], [0], [0, 0, 1, 0], [], []>} : vector<8x128xbf16>, vector<2x128xbf16>, vector<8x2xf32> -> vector<8x2xf32>
    %29 = vector.broadcast %6 : vector<8x1xf32> to vector<8x2xf32>
    %30 = arith.addf %28, %29 : vector<8x2xf32>
    %31 = math.tanh %30 : vector<8x2xf32>
    %cst_17 = arith.constant 1.000000e+01 : f32
    %32 = vector.broadcast %cst_17 : f32 to vector<8x2xf32>
    %33 = arith.mulf %32, %31 : vector<8x2xf32>
    %c0_18 = arith.constant 0 : index
    %c0_19 = arith.constant 0 : index
    %34 = vector.load %arg5[%c0_18, %c0_19] : memref<8x2xf32, #tpu.memory_space<vmem>>, vector<8x2xf32>
    tpu.vector_store %arg5[%c0_18, %c0_19], %33 {strides = array<i32>} : memref<8x2xf32, #tpu.memory_space<vmem>>, vector<8x2xf32>,
    return
  }
  func.func @transform_0(%arg0: i32) -> (i32, i32) {
    %c0_i32 = arith.constant 0 : i32
    %c0_i32_0 = arith.constant 0 : i32
    return %arg0, %c0_i32 : i32, i32
  }
  func.func @transform_1(%arg0: i32) -> (i32, i32) {
    %c0_i32 = arith.constant 0 : i32
    %c0_i32_0 = arith.constant 0 : i32
    return %arg0, %c0_i32 : i32, i32
  }
  func.func @transform_2(%arg0: i32) -> (i32, i32) {
    %c0_i32 = arith.constant 0 : i32
    %c0_i32_0 = arith.constant 0 : i32
    %c0_i32_1 = arith.constant 0 : i32
    return %c0_i32, %c0_i32_0 : i32, i32
  }
  func.func @transform_3(%arg0: i32) -> (i32, i32) {
    %c0_i32 = arith.constant 0 : i32
    %c0_i32_0 = arith.constant 0 : i32
    %c0_i32_1 = arith.constant 0 : i32
    return %c0_i32, %c0_i32_0 : i32, i32
  }
  func.func @transform_4(%arg0: i32) -> (i32, i32) {
    %c0_i32 = arith.constant 0 : i32
    %c0_i32_0 = arith.constant 0 : i32
    return %c0_i32, %arg0 : i32, i32
  }
}

</mosaic_0001>

<llo_original>
// kernel: tpu_custom_call.1
$region0: #{tpu_custom_call.1}
  #allocation0 [shape = 'u32[]', space=smem, size = 0x4, offset = 0x4, fixed_abs, tag = 'smem constant byte address 0x4 - core index']
  #allocation1 [shape = 'u32[144,128]{1,0:T(1,128)}', space=vmem, size = 0x12000, scoped, tag = 'internal scratch']
  %s0 = inlined_call_operand.hbm [shape: f32[2,16], index: 0, kind: input, shape index: {}]
  %s1 = inlined_call_operand.vmem [shape: f32[2,8], index: 1, kind: input, shape index: {}]
  %s2 = inlined_call_operand.hbm [shape: f32[48,128], index: 2, kind: input, shape index: {}]
  %s3 = inlined_call_operand.hbm [shape: bf16[128,128], index: 3, kind: input, shape index: {}]
  %s4 = inlined_call_operand.vmem [shape: f32[8,2], index: 4, kind: output, shape index: {}]
  %s5 = sld [smem:[#allocation0]]
  $region38: #{tpu_custom_call.1} parent=0
    _
  %s7 = ssub.s32 1, %s5
  %s8 = scalar_select 0, %s7, %s5
  $region1: #{tpu_custom_call.1} parent=0
    #allocation2 [shape = 'u8[1024]{0}', space=vmem, size = 0x400, scoped, tag = 'input window, operand 0, single buffered']
    #allocation3 [shape = 's32[1]{0}', space=sflag, size = 0x4, scoped, tag = 'scoped memory for tpu_custom_call.1']
    #allocation4 [shape = 'u8[24576]{0}', space=vmem, size = 0x6000, scoped, tag = 'input window, operand 2, single buffered']
    #allocation5 [shape = 's32[1]{0}', space=sflag, size = 0x4, scoped, tag = 'scoped memory for tpu_custom_call.1']
    #allocation6 [shape = 'u8[32768]{0}', space=vmem, size = 0x8000, scoped, tag = 'input window, operand 3, single buffered']
    %9 = vsyncpa [#allocation3], 0
    %10 = vsyncpa [#allocation5], 0
    // Predicated region
    $region2: #{tpu_custom_call.1} parent=1 // pred_check
      _
    $region3: #{tpu_custom_call.1} parent=1 // pred_check_branch
      %12 = sbr.rel (0) target = $region5
    $region4: #{tpu_custom_call.1} parent=1 // pred_region
      %s14 = ssub.s32 32, 32
      %15 = vsyncadd [#allocation3], %s14
      %s17 = sshll.u32 [#allocation2], 4
      %s18 = int_to_ptr.vmem [resolvable:$true] %s17
      %20 = dma.hbm_to_vmem [thread:$0]  %s0, 32, %s18, [#allocation3]
    $region5: #{tpu_custom_call.1} parent=1 // pred_fallthru
      _
    // Predicated region
    $region6: #{tpu_custom_call.1} parent=1 // pred_check
      _
    $region7: #{tpu_custom_call.1} parent=1 // pred_check_branch
      %22 = sbr.rel (0) target = $region9
    $region8: #{tpu_custom_call.1} parent=1 // pred_region
      _
    $region9: #{tpu_custom_call.1} parent=1 // pred_fallthru
      _
    // Predicated region
    $region10: #{tpu_custom_call.1} parent=1 // pred_check
      _
    $region11: #{tpu_custom_call.1} parent=1 // pred_check_branch
      %24 = sbr.rel (0) target = $region13
    $region12: #{tpu_custom_call.1} parent=1 // pred_region
      %s26 = ssub.s32 768, 768
      %27 = vsyncadd [#allocation5], %s26
      %s28 = sshll.u32 [#allocation4], 4
      %s29 = int_to_ptr.vmem [resolvable:$true] %s28
      %34 = dma.hbm_to_vmem [thread:$0]  %s2, 768, %s29, [#allocation5], 128, 128, 8
    $region13: #{tpu_custom_call.1} parent=1 // pred_fallthru
      _
    // Predicated region
    $region14: #{tpu_custom_call.1} parent=1 // pred_check
      _
    $region15: #{tpu_custom_call.1} parent=1 // pred_check_branch
      %36 = sbr.rel (0) target = $region17
    $region16: #{tpu_custom_call.1} parent=1 // pred_region
      %s38 = ssub.s32 1024, 1024
      %39 = vsyncadd [#allocation5], %s38
      %s40 = sshll.u32 [#allocation6], 4
      %s41 = int_to_ptr.vmem [resolvable:$true] %s40
      %46 = dma.hbm_to_vmem [thread:$0]  %s3, 1024, %s41, [#allocation5], 64, 64, 4
    $region17: #{tpu_custom_call.1} parent=1 // pred_fallthru
      _
    // Predicated region
    $region18: #{tpu_custom_call.1} parent=1 // pred_check
      _
    $region19: #{tpu_custom_call.1} parent=1 // pred_check_branch
      %48 = sbr.rel (0) target = $region21
    $region20: #{tpu_custom_call.1} parent=1 // pred_region
      %49 = dma.done [#allocation3], 32
    $region21: #{tpu_custom_call.1} parent=1 // pred_fallthru
      _
    // Predicated region
    $region22: #{tpu_custom_call.1} parent=1 // pred_check
      _
    $region23: #{tpu_custom_call.1} parent=1 // pred_check_branch
      %51 = sbr.rel (0) target = $region25
    $region24: #{tpu_custom_call.1} parent=1 // pred_region
      %52 = dma.done [#allocation5], 768
    $region25: #{tpu_custom_call.1} parent=1 // pred_fallthru
      _
    // Predicated region
    $region26: #{tpu_custom_call.1} parent=1 // pred_check
      _
    $region27: #{tpu_custom_call.1} parent=1 // pred_check_branch
      %54 = sbr.rel (0) target = $region29
    $region28: #{tpu_custom_call.1} parent=1 // pred_region
      %55 = dma.done [#allocation5], 1024
    $region29: #{tpu_custom_call.1} parent=1 // pred_fallthru
      _
    %v57 = vld [vmem:[#allocation2] sm:$0x3]
    %v58 = vpack.c.bf16 %v57, %v57
    %v59 = vld [vmem:[%s1] sm:$0x3]
    %v60 = vpack.c.bf16 %v59, %v59
    %v61 = vld [vmem:[#allocation4] sm:$0x1]
    %v62 = vld [vmem:[#allocation4 + $0x1] sm:$0x1]
    %v63 = vld [vmem:[#allocation4 + $0x8] sm:$0xff]
    %v64 = vld [vmem:[#allocation4 + $0x10] sm:$0xff]
    %v65 = vld [vmem:[#allocation4 + $0x18] sm:$0xff]
    %v66 = vpack.c.bf16 %v65, %v64
    %v67 = vld [vmem:[#allocation4 + $0x20] sm:$0xff]
    %v68 = vpack.c.bf16 %v67, %v67
    %v69 = vld [vmem:[#allocation4 + $0x28] sm:$0xff]
    %v70 = vpack.c.bf16 %v69, %v69
    %v71 = vld [vmem:[#allocation6] sm:$0xf]
    %v72 = vld [vmem:[#allocation6 + $0x4] sm:$0xf]
    %v73 = vld [vmem:[#allocation6 + $0x8] sm:$0xf]
    %v74 = vld [vmem:[#allocation6 + $0xc] sm:$0xf]
    %v75 = vld [vmem:[#allocation6 + $0x10] sm:$0xf]
    %v76 = vld [vmem:[#allocation6 + $0x14] sm:$0xf]
    %v77 = vld [vmem:[#allocation6 + $0x18] sm:$0xf]
    %v78 = vld [vmem:[#allocation6 + $0x1c] sm:$0xf]
    %v79 = vld [vmem:[#allocation6 + $0x20] sm:$0xf]
    %v80 = vld [vmem:[#allocation6 + $0x24] sm:$0xf]
    %v81 = vld [vmem:[#allocation6 + $0x28] sm:$0xf]
    %v82 = vld [vmem:[#allocation6 + $0x2c] sm:$0xf]
    %v83 = vld [vmem:[#allocation6 + $0x30] sm:$0xf]
    %v84 = vld [vmem:[#allocation6 + $0x34] sm:$0xf]
    %v85 = vld [vmem:[#allocation6 + $0x38] sm:$0xf]
    %v86 = vld [vmem:[#allocation6 + $0x3c] sm:$0xf]
    %vm87 = vcmask 64512
    %v89 = vsel %vm87, %v60, 0
    %vm91 = vcmask 1043456
    %v93 = vsel %vm91, %v68, 0
    %95 = vmatprep.subr.bf16.mxu0 0
    %96 = vmatpush1.bf16.msra.mxu0 %v93
    %97 = vmatprep.subr.bf16.mxu0 0
    %98 = vmatpush1.bf16.msra.mxu0 0
    %99 = vmatprep.subr.bf16.mxu0 0
    %100 = vmatpush1.bf16.msra.mxu0 0
    %101 = vmatprep.subr.bf16.mxu0 0
    %102 = vmatpush1.bf16.msra.mxu0 0
    %103 = vmatprep.subr.bf16.mxu0 0
    %104 = vmatpush1.bf16.msra.mxu0 0
    %105 = vmatprep.subr.bf16.mxu0 0
    %106 = vmatpush1.bf16.msra.mxu0 0
    %107 = vmatprep.subr.bf16.mxu0 0
    %108 = vmatpush1.bf16.msra.mxu0 0
    %109 = vmatprep.subr.bf16.mxu0 0
    %110 = vmatpush1.bf16.msra.mxu0 0
    %111 = vmatprep.subr.bf16.mxu0 0
    %112 = vmatpush1.bf16.msra.mxu0 0
    %113 = vmatprep.subr.bf16.mxu0 0
    %114 = vmatpush1.bf16.msra.mxu0 0
    %115 = vmatprep.subr.bf16.mxu0 0
    %116 = vmatpush1.bf16.msra.mxu0 0
    %117 = vmatprep.subr.bf16.mxu0 0
    %118 = vmatpush1.bf16.msra.mxu0 0
    %119 = vmatprep.subr.bf16.mxu0 0
    %120 = vmatpush1.bf16.msra.mxu0 0
    %121 = vmatprep.subr.bf16.mxu0 0
    %122 = vmatpush1.bf16.msra.mxu0 0
    %123 = vmatprep.subr.bf16.mxu0 0
    %124 = vmatpush1.bf16.msra.mxu0 0
    %125 = vmatprep.subr.bf16.mxu0 0
    %126 = vmatpush1.bf16.msra.mxu0 0
    %127 = vmatprep.mubr.bf16.mxu0 0
    %128 = vmatmul.mubr.bf16.gmra.mrb[0].mxu0 %v89
    %v129 = vpop.f32.mrb[0].mxu0
    %v130 = vadd.f32 0.0, %v129
    %v131 = vpop.f32.mrb[0].mxu0
    %v132 = vpop.f32.mrb[0].mxu0
    %v133 = vpop.f32.mrb[0].mxu0
    %134 = vdwg.mxu0
    %vm135 = vcmask 130048
    %v137 = vsel %vm135, %v58, 0
    %139 = vmatprep.subr.bf16.mxu0 0
    %140 = vmatpush1.bf16.msra.mxu0 %v66
    %141 = vmatprep.subr.bf16.mxu0 0
    %142 = vmatpush1.bf16.msra.mxu0 0
    %143 = vmatprep.subr.bf16.mxu0 0
    %144 = vmatpush1.bf16.msra.mxu0 0
    %145 = vmatprep.subr.bf16.mxu0 0
    %146 = vmatpush1.bf16.msra.mxu0 0
    %147 = vmatprep.subr.bf16.mxu0 0
    %148 = vmatpush1.bf16.msra.mxu0 0
    %149 = vmatprep.subr.bf16.mxu0 0
    %150 = vmatpush1.bf16.msra.mxu0 0
    %151 = vmatprep.subr.bf16.mxu0 0
    %152 = vmatpush1.bf16.msra.mxu0 0
    %153 = vmatprep.subr.bf16.mxu0 0
    %154 = vmatpush1.bf16.msra.mxu0 0
    %155 = vmatprep.subr.bf16.mxu0 0
    %156 = vmatpush1.bf16.msra.mxu0 0
    %157 = vmatprep.subr.bf16.mxu0 0
    %158 = vmatpush1.bf16.msra.mxu0 0
    %159 = vmatprep.subr.bf16.mxu0 0
    %160 = vmatpush1.bf16.msra.mxu0 0
    %161 = vmatprep.subr.bf16.mxu0 0
    %162 = vmatpush1.bf16.msra.mxu0 0
    %163 = vmatprep.subr.bf16.mxu0 0
    %164 = vmatpush1.bf16.msra.mxu0 0
    %165 = vmatprep.subr.bf16.mxu0 0
    %166 = vmatpush1.bf16.msra.mxu0 0
    %167 = vmatprep.subr.bf16.mxu0 0
    %168 = vmatpush1.bf16.msra.mxu0 0
    %169 = vmatprep.subr.bf16.mxu0 0
    %170 = vmatpush1.bf16.msra.mxu0 0
    %171 = vmatprep.mubr.bf16.mxu0 0
    %172 = vmatmul.mubr.bf16.gmra.mrb[0].mxu0 %v137
    %v173 = vpop.f32.mrb[0].mxu0
    %v174 = vadd.f32 %v130, %v173
    %v175 = vpop.f32.mrb[0].mxu0
    %v176 = vpop.f32.mrb[0].mxu0
    %v177 = vpop.f32.mrb[0].mxu0
    %178 = vdwg.mxu0
    %v179 = vlaneseq
    %v180 = vshrl.u32 %v179, 7
    %v181 = vsub.s32 0, %v180
    %v182 = vrot.slane %v61, %v181
    %v183 = vadd.f32 %v174, %v182
    %v184 = vmax.f32 %v183, 0.0
    %v185 = vpack.c.bf16 %v184, %v184
    %v186 = vlaneseq
    %v187 = vshrl.u32 %v186, 7
    %v188 = vsub.s32 0, %v187
    %v189 = vrot.slane %v62, %v188
    %v206 = vunpack.c.l.b16 %v71
    %v207 = vunpack.c.l.b16 %v72
    %v208 = vunpack.c.l.b16 %v73
    %v209 = vunpack.c.l.b16 %v74
    %v210 = vunpack.c.l.b16 %v75
    %v211 = vunpack.c.l.b16 %v76
    %v212 = vunpack.c.l.b16 %v77
    %v213 = vunpack.c.l.b16 %v78
    %v214 = vunpack.c.l.b16 %v79
    %v215 = vunpack.c.l.b16 %v80
    %v216 = vunpack.c.l.b16 %v81
    %v217 = vunpack.c.l.b16 %v82
    %v218 = vunpack.c.l.b16 %v83
    %v219 = vunpack.c.l.b16 %v84
    %v220 = vunpack.c.l.b16 %v85
    %v221 = vunpack.c.l.b16 %v86
    %v222 = vpack.c.b16 %v207, %v206
    %v223 = vpack.c.b16 %v209, %v208
    %v224 = vpack.c.b16 %v211, %v210
    %v225 = vpack.c.b16 %v213, %v212
    %v226 = vpack.c.b16 %v215, %v214
    %v227 = vpack.c.b16 %v217, %v216
    %v228 = vpack.c.b16 %v219, %v218
    %v229 = vpack.c.b16 %v221, %v220
    %238 = vmatprep.subr.bf16.mxu0 0
    %239 = vmatpush1.bf16.msra.mxu0 %v222
    %240 = vmatprep.subr.bf16.mxu0 0
    %241 = vmatpush1.bf16.msra.mxu0 %v223
    %242 = vmatprep.subr.bf16.mxu0 0
    %243 = vmatpush1.bf16.msra.mxu0 %v224
    %244 = vmatprep.subr.bf16.mxu0 0
    %245 = vmatpush1.bf16.msra.mxu0 %v225
    %246 = vmatprep.subr.bf16.mxu0 0
    %247 = vmatpush1.bf16.msra.mxu0 %v226
    %248 = vmatprep.subr.bf16.mxu0 0
    %249 = vmatpush1.bf16.msra.mxu0 %v227
    %250 = vmatprep.subr.bf16.mxu0 0
    %251 = vmatpush1.bf16.msra.mxu0 %v228
    %252 = vmatprep.subr.bf16.mxu0 0
    %253 = vmatpush1.bf16.msra.mxu0 %v229
    %254 = vmatprep.subr.bf16.mxu0 0
    %255 = vmatpush1.bf16.msra.mxu0 0
    %256 = vmatprep.subr.bf16.mxu0 0
    %257 = vmatpush1.bf16.msra.mxu0 0
    %258 = vmatprep.subr.bf16.mxu0 0
    %259 = vmatpush1.bf16.msra.mxu0 0
    %260 = vmatprep.subr.bf16.mxu0 0
    %261 = vmatpush1.bf16.msra.mxu0 0
    %262 = vmatprep.subr.bf16.mxu0 0
    %263 = vmatpush1.bf16.msra.mxu0 0
    %264 = vmatprep.subr.bf16.mxu0 0
    %265 = vmatpush1.bf16.msra.mxu0 0
    %266 = vmatprep.subr.bf16.mxu0 0
    %267 = vmatpush1.bf16.msra.mxu0 0
    %268 = vmatprep.subr.bf16.mxu0 0
    %269 = vmatpush1.bf16.msra.mxu0 0
    %270 = vmatprep.mubr.bf16.mxu0 0
    %271 = vmatmul.mubr.bf16.gmra.mrb[0].mxu0 %v185
    %v272 = vpop.f32.mrb[0].mxu0
    %v273 = vadd.f32 %v189, %v272
    %v274 = vpop.f32.mrb[0].mxu0
    %v275 = vpop.f32.mrb[0].mxu0
    %v276 = vpop.f32.mrb[0].mxu0
    %277 = vdwg.mxu0
    %v278 = vmax.f32 %v273, 0.0
    %v279 = vpack.c.bf16 %v278, %v278
    %281 = vset.pattern.permute.xlu0 0
    %282 = vperm.xlu0 %281, %v63
    %v283 = vpop.permute.xlu0 %282
    %285 = vmatprep.subr.bf16.mxu0 0
    %286 = vmatpush1.bf16.xpose.msra.mxu0 %v279
    %287 = vmatprep.subr.bf16.mxu0 0
    %288 = vmatpush1.bf16.xpose.msra.mxu0 0
    %289 = vmatprep.subr.bf16.mxu0 0
    %290 = vmatpush1.bf16.xpose.msra.mxu0 0
    %291 = vmatprep.subr.bf16.mxu0 0
    %292 = vmatpush1.bf16.xpose.msra.mxu0 0
    %293 = vmatprep.subr.bf16.mxu0 0
    %294 = vmatpush1.bf16.xpose.msra.mxu0 0
    %295 = vmatprep.subr.bf16.mxu0 0
    %296 = vmatpush1.bf16.xpose.msra.mxu0 0
    %297 = vmatprep.subr.bf16.mxu0 0
    %298 = vmatpush1.bf16.xpose.msra.mxu0 0
    %299 = vmatprep.subr.bf16.mxu0 0
    %300 = vmatpush1.bf16.xpose.msra.mxu0 0
    %301 = vmatprep.subr.bf16.mxu0 0
    %302 = vmatpush1.bf16.xpose.msra.mxu0 0
    %303 = vmatprep.subr.bf16.mxu0 0
    %304 = vmatpush1.bf16.xpose.msra.mxu0 0
    %305 = vmatprep.subr.bf16.mxu0 0
    %306 = vmatpush1.bf16.xpose.msra.mxu0 0
    %307 = vmatprep.subr.bf16.mxu0 0
    %308 = vmatpush1.bf16.xpose.msra.mxu0 0
    %309 = vmatprep.subr.bf16.mxu0 0
    %310 = vmatpush1.bf16.xpose.msra.mxu0 0
    %311 = vmatprep.subr.bf16.mxu0 0
    %312 = vmatpush1.bf16.xpose.msra.mxu0 0
    %313 = vmatprep.subr.bf16.mxu0 0
    %314 = vmatpush1.bf16.xpose.msra.mxu0 0
    %315 = vmatprep.subr.bf16.mxu0 0
    %316 = vmatpush1.bf16.xpose.msra.mxu0 0
    %317 = vmatprep.mubr.bf16.mxu0 0
    %318 = vmatmul.mubr.bf16.gmra.mrb[0].mxu0 %v70
    %v319 = vpop.f32.mrb[0].mxu0
    %v320 = vadd.f32 %v283, %v319
    %v321 = vpop.f32.mrb[0].mxu0
    %v322 = vpop.f32.mrb[0].mxu0
    %v323 = vpop.f32.mrb[0].mxu0
    %324 = vdwg.mxu0
    %v325 = vtanh.pop %v320
    %v326 = vmul.f32 %v325, 10.0
    %vm327 = vcmask 15360
    %328 = vst.msk [vmem:[%s4] sm:$0xff] %vm327, %v326
    // Predicated region
    $region30: #{tpu_custom_call.1} parent=1 // pred_check
      _
    $region31: #{tpu_custom_call.1} parent=1 // pred_check_branch
      %330 = sbr.rel (0) target = $region33
    $region32: #{tpu_custom_call.1} parent=1 // pred_region
      _
    $region33: #{tpu_custom_call.1} parent=1 // pred_fallthru
      _
    // Predicated region
    $region34: #{tpu_custom_call.1} parent=1 // pred_check
      _
    $region35: #{tpu_custom_call.1} parent=1 // pred_check_branch
      %332 = sbr.rel (0) target = $region37
    $region36: #{tpu_custom_call.1} parent=1 // pred_region
      _
    $region37: #{tpu_custom_call.1} parent=1 // pred_fallthru
      _
    %333 = vsyncpa [#allocation3], 1
    %334 = vsyncpa [#allocation5], 1

</llo_original>
